<compile_context>
chip_gen: v6e
topology: v6e:2x2x1
jax: 0.10.0
libtpu: 0.0.40
codegen_flags: <defaults>
</compile_context>

<pallas_src>
from abc import ABC, abstractmethod

import jax
import jax.numpy as jnp
from jax.experimental import pallas as pl
from jax.experimental.pallas import tpu as pltpu


LANES = 128
TARGET_BLOCK_ELEMS = 2 ** 21      # 2M elements: 8 MiB f32 / 4 MiB bf16 per block
_VMEM_LIMIT_FLOOR = 32 << 20      # safe on v5e/v6e/v7x (physical >= 64 MiB/TC)
_VMEM_LIMIT_CAP = 48 << 20


def _make_partial_sum_kernel(tile_rows, fold, tiles_per_slice, nslices, main_rows):
    """Build the streaming partial-sum kernel with static tiling constants."""
    partial_rows = main_rows % tile_rows  # static: rows valid in the last tile

    def kernel(x_ref, o_ref):
        c = pl.program_id(0)   # slice ("parallel")
        t = pl.program_id(1)   # position along the reduction ("arbitrary") axis

        @pl.when(t == 0)
        def _():
            o_ref[...] = jnp.zeros_like(o_ref)

        x = x_ref[...].astype(jnp.float32)

        if partial_rows:
            # Emitted only when the global last tile is partial: rows past the
            # end of the slab hold undefined VMEM data -> zero them out.
            row0 = (c * tiles_per_slice + t) * tile_rows
            rid = jax.lax.broadcasted_iota(jnp.int32, (tile_rows, 1), 0)
            x = jnp.where(rid + row0 < main_rows, x, 0.0)

        # (tile_rows, 128) -> (tile_rows // fold, fold, 128), reduce leading
        # axis: fold*128 independent f32 accumulation lanes.  Pure VPU work,
        # fully hidden under the HBM DMA of the next block (memory-bound).
        o_ref[...] += x.reshape(-1, fold, x.shape[1]).sum(axis=0)

    return kernel


def pallas_mean_loss(x: jax.Array, *, max_block_elems: int = TARGET_BLOCK_ELEMS) -> jax.Array:
    """Scalar mean over all elements of x via a Pallas streaming reduction."""
    n_elems = int(x.size)
    if n_elems == 0:
        return jnp.array(jnp.nan, jnp.float32)   # match jnp.mean on empty input

    flat = x.reshape(-1)
    if flat.dtype.itemsize not in (1, 2, 4):
        # TODO(synk): 64-bit inputs are reduced in float32 (documented drift vs f64).
        flat = flat.astype(jnp.float32)
    sublane = {4: 8, 2: 16, 1: 32}[flat.dtype.itemsize]

    # Rows fully covered by whole (sublane, 128) hardware tiles.
    main_rows = (n_elems // LANES) // sublane * sublane
    slab_elems = main_rows * LANES

    if main_rows == 0:
        # Input smaller than one hardware tile: plain-JAX reduce.
        return jnp.sum(flat, dtype=jnp.float32) / n_elems

    if slab_elems == n_elems:
        slab = flat.reshape(main_rows, LANES)    # zero-copy in the common case
    else:
        # TODO(synk): XLA may materialize this prefix slice for irregular sizes;
        # still strictly cheaper than a whole-array jnp.pad (no zero-fill writes).
        slab = flat[:slab_elems].reshape(main_rows, LANES)

    target_rows = max(sublane, (max_block_elems // LANES) // sublane * sublane)
    tile_rows = min(target_rows, main_rows)
    fold = 64 if tile_rows % 64 == 0 else sublane          # accumulator rows

    num_tiles = pl.cdiv(main_rows, tile_rows)
    # Two equal slices only when the tile count splits evenly: on v7x both
    # TensorCores then share the stream; otherwise one sequential sweep (no
    # loss on single-core v5e/v6e, and no stranded odd tile either way).
    nslices = 2 if (num_tiles >= 2 and num_tiles % 2 == 0) else 1
    tiles_per_slice = num_tiles // nslices

    block_bytes = tile_rows * LANES * slab.dtype.itemsize
    vmem_limit = int(min(max(2 * block_bytes + (8 << 20), _VMEM_LIMIT_FLOOR),
                         _VMEM_LIMIT_CAP))

    kernel = _make_partial_sum_kernel(tile_rows, fold, tiles_per_slice,
                                      nslices, main_rows)

    partials = pl.pallas_call(
        kernel,
        out_shape=jax.ShapeDtypeStruct((nslices * fold, LANES), jnp.float32),
        grid_spec=pltpu.PrefetchScalarGridSpec(
            num_scalar_prefetch=0,
            grid=(nslices, tiles_per_slice),
            in_specs=[
                pl.BlockSpec((tile_rows, LANES),
                             lambda c, t: (c * tiles_per_slice + t, 0)),
            ],
            out_specs=pl.BlockSpec((fold, LANES), lambda c, t: (c, 0)),
        ),
        compiler_params=pltpu.CompilerParams(
            dimension_semantics=("parallel", "arbitrary"),
            vmem_limit_bytes=vmem_limit,
        ),
        cost_estimate=pl.CostEstimate(
            flops=slab_elems,
            transcendentals=0,
            bytes_accessed=slab_elems * slab.dtype.itemsize
            + nslices * fold * LANES * 4,
        ),
    )(slab)

    total = jnp.sum(partials, dtype=jnp.float32)
    if slab_elems < n_elems:
        # Lane/sublane tail: fewer than sublane*128 elements, tiny JAX reduce.
        total = total + jnp.sum(flat[slab_elems:], dtype=jnp.float32)
    return total / n_elems


class Loss(ABC):
    """JAX mirror of torchebm.core.losses.Loss (abstract base)."""

    def __init__(self):
        self.device = None

    @abstractmethod
    def forward(self, x: jax.Array, *args, **kwargs) -> jax.Array:
        ...

    def __call__(self, x: jax.Array, *args, **kwargs) -> jax.Array:
        return self.forward(x, *args, **kwargs)

    def to(self, device):
        self.device = device
        return self


class MeanLoss(Loss):
    """Minimal concrete Loss: scalar mean of the input energies."""

    def forward(self, x: jax.Array, *args, **kwargs) -> jax.Array:
        return pallas_mean_loss(x)


if __name__ == "__main__":
    keys = jax.random.split(jax.random.PRNGKey(0), 3)
    loss_fn = MeanLoss().to("tpu")

    # NCHW-shaped synthetic energies: batch=2, channels=4, spatial=16x16.
    x = jax.random.normal(keys[0], (2, 4, 16, 16), dtype=jnp.float32)
    loss = jax.block_until_ready(loss_fn(x))
    ref = jnp.mean(x)
    assert jnp.allclose(loss, ref, atol=1e-5, rtol=1e-5), (loss, ref)

    # A second small shape: single full tile, lane-aligned path.
    x2 = jax.random.normal(keys[1], (4, 8, 32, 32), dtype=jnp.float32)
    loss2 = jax.block_until_ready(loss_fn(x2))
    ref2 = jnp.mean(x2)
    assert jnp.allclose(loss2, ref2, atol=1e-5, rtol=1e-5), (loss2, ref2)

    # Irregular element count with a small block override: exercises the
    # two-slice grid, the in-kernel partial-tile mask and the wrapper tail.
    x3 = jax.random.normal(keys[2], (2, 3, 23, 23), dtype=jnp.float32)
    loss3 = jax.block_until_ready(pallas_mean_loss(x3, max_block_elems=2048))
    ref3 = jnp.mean(x3)
    assert jnp.allclose(loss3, ref3, atol=1e-5, rtol=1e-5), (loss3, ref3)

    print("KERNEL_OK")
</pallas_src>

<mosaic_0001>
module attributes {stable_mosaic.version = 11 : i64} {
  func.func @kernel(%arg0: i32, %arg1: i32, %arg2: memref<16x128xf32, #tpu.memory_space<vmem>>, %arg3: memref<8x128xf32, #tpu.memory_space<vmem>>) attributes {dimension_semantics = [#tpu.dimension_semantics<parallel>, #tpu.dimension_semantics<arbitrary>], iteration_bounds = array<i64: 1, 1>, scalar_prefetch = 0 : i64, scratch_operands = 0 : i64, tpu.core_type = #tpu.core_type<tc>, window_params = [{transform_indices = @transform_0, window_bounds = array<i64: 16, 128>}, {transform_indices = @transform_1, window_bounds = array<i64: 8, 128>}]} {
    %c0_i32 = arith.constant 0 : i32
    %0 = arith.cmpi eq, %arg1, %c0_i32 : i32
    %1 = arith.extui %0 : i1 to i32
    %c0_i32_0 = arith.constant 0 : i32
    %2 = arith.cmpi ne, %1, %c0_i32_0 : i32
    scf.if %2 {
      %cst_6 = arith.constant 0.000000e+00 : f32
      %9 = vector.broadcast %cst_6 : f32 to vector<8x128xf32>
      %c0_7 = arith.constant 0 : index
      %c0_8 = arith.constant 0 : index
      %10 = vector.load %arg3[%c0_7, %c0_8] : memref<8x128xf32, #tpu.memory_space<vmem>>, vector<8x128xf32>
      tpu.vector_store %arg3[%c0_7, %c0_8], %9 {strides = array<i32>} : memref<8x128xf32, #tpu.memory_space<vmem>>, vector<8x128xf32>,
    } else {
    }
    %c0 = arith.constant 0 : index
    %c0_1 = arith.constant 0 : index
    %3 = vector.load %arg2[%c0, %c0_1] : memref<16x128xf32, #tpu.memory_space<vmem>>, vector<16x128xf32>
    %c0_2 = arith.constant 0 : index
    %c0_3 = arith.constant 0 : index
    %4 = vector.load %arg3[%c0_2, %c0_3] : memref<8x128xf32, #tpu.memory_space<vmem>>, vector<8x128xf32>
    %5 = vector.shape_cast %3 : vector<16x128xf32> to vector<2x8x128xf32>
    %cst = arith.constant dense<0.000000e+00> : vector<8x128xf32>
    %6 = vector.multi_reduction <add>, %5, %cst [0] : vector<2x8x128xf32> to vector<8x128xf32>
    %7 = arith.addf %4, %6 : vector<8x128xf32>
    %c0_4 = arith.constant 0 : index
    %c0_5 = arith.constant 0 : index
    %8 = vector.load %arg3[%c0_4, %c0_5] : memref<8x128xf32, #tpu.memory_space<vmem>>, vector<8x128xf32>
    tpu.vector_store %arg3[%c0_4, %c0_5], %7 {strides = array<i32>} : memref<8x128xf32, #tpu.memory_space<vmem>>, vector<8x128xf32>,
    return
  }
  func.func @transform_0(%arg0: i32, %arg1: i32) -> (i32, i32) {
    %c1_i32 = arith.constant 1 : i32
    %0 = arith.muli %arg0, %c1_i32 : i32
    %1 = arith.addi %0, %arg1 : i32
    %c0_i32 = arith.constant 0 : i32
    %c0_i32_0 = arith.constant 0 : i32
    return %1, %c0_i32 : i32, i32
  }
  func.func @transform_1(%arg0: i32, %arg1: i32) -> (i32, i32) {
    %c0_i32 = arith.constant 0 : i32
    %c0_i32_0 = arith.constant 0 : i32
    return %arg0, %c0_i32 : i32, i32
  }
}

</mosaic_0001>

<llo_original>
// kernel: tpu_custom_call.1
$region0: #{tpu_custom_call.1}
  #allocation0 [shape = 'u32[]', space=smem, size = 0x4, offset = 0x4, fixed_abs, tag = 'smem constant byte address 0x4 - core index']
  #allocation1 [shape = 'u32[144,128]{1,0:T(1,128)}', space=vmem, size = 0x12000, scoped, tag = 'internal scratch']
  %s0 = inlined_call_operand.hbm [shape: f32[16,128], index: 0, kind: input, shape index: {}]
  %s1 = inlined_call_operand.hbm [shape: f32[8,128], index: 1, kind: output, shape index: {}]
  %s2 = sld [smem:[#allocation0]]
  $region22: #{tpu_custom_call.1} parent=0
    _
  %s4 = ssub.s32 1, %s2
  %s5 = scalar_select 0, %s4, %s2
  $region1: #{tpu_custom_call.1} parent=0
    #allocation2 [shape = 'u8[8192]{0}', space=vmem, size = 0x2000, scoped, tag = 'input window, operand 0, single buffered']
    #allocation3 [shape = 's32[1]{0}', space=sflag, size = 0x4, scoped, tag = 'scoped memory for tpu_custom_call.1']
    #allocation4 [shape = 's32[1]{0}', space=sflag, size = 0x4, scoped, tag = 'scoped memory for tpu_custom_call.1']
    #allocation5 [shape = 'u8[4096]{0}', space=vmem, size = 0x1000, scoped, tag = 'output window, operand 0, single buffered']
    %6 = vsyncpa [#allocation3], 0
    %7 = vsyncpa [#allocation4], 0
    // Predicated region
    $region2: #{tpu_custom_call.1} parent=1 // pred_check
      _
    $region3: #{tpu_custom_call.1} parent=1 // pred_check_branch
      %9 = sbr.rel (0) target = $region5
    $region4: #{tpu_custom_call.1} parent=1 // pred_region
      %s10 = sadd.s32 0, 0
      %s11 = smul.u32 2, %s10
      %s13 = ssub.s32 256, 256
      %14 = vsyncadd [#allocation3], %s13
      %s15 = smul.addr %s11, 128
      %s16 = scalar_lea.hbm %s0, %s15
      %s17 = sshll.u32 [#allocation2], 4
      %s18 = int_to_ptr.vmem [resolvable:$true] %s17
      %23 = dma.hbm_to_vmem [thread:$0]  %s16, 256, %s18, [#allocation3], 128, 128, 8
    $region5: #{tpu_custom_call.1} parent=1 // pred_fallthru
      _
    // Predicated region
    $region6: #{tpu_custom_call.1} parent=1 // pred_check
      _
    $region7: #{tpu_custom_call.1} parent=1 // pred_check_branch
      %25 = sbr.rel (0) target = $region9
    $region8: #{tpu_custom_call.1} parent=1 // pred_region
      %26 = dma.done [#allocation3], 256
    $region9: #{tpu_custom_call.1} parent=1 // pred_fallthru
      _
    %s27 = sadd.s32 0, 0
    %s28 = smul.u32 2, %s27
    %p29 = scmp.eq.s32.totalorder 0, 0
    // Predicated region
    $region10: #{tpu_custom_call.1} parent=1 // pred_check
      %p30 = pneg %p29
    $region11: #{tpu_custom_call.1} parent=1 // pred_check_branch
      %32 = sbr.rel (%p30) target = $region13
    $region12: #{tpu_custom_call.1} parent=1 // pred_region
      %33 = vst [vmem:[#allocation5] sm:$0xff] 0.0
    $region13: #{tpu_custom_call.1} parent=1 // pred_fallthru
      _
    %v34 = vld [vmem:[#allocation2] sm:$0xff]
    %v35 = vld [vmem:[#allocation2 + $0x8] sm:$0xff]
    %v36 = vld [vmem:[#allocation5] sm:$0xff]
    %v37 = vadd.f32 %v34, %v35
    %v38 = vadd.f32 %v36, %v37
    %39 = vst [vmem:[#allocation5] sm:$0xff] %v38
    // Predicated region
    $region14: #{tpu_custom_call.1} parent=1 // pred_check
      _
    $region15: #{tpu_custom_call.1} parent=1 // pred_check_branch
      %41 = sbr.rel (0) target = $region17
    $region16: #{tpu_custom_call.1} parent=1 // pred_region
      %s43 = ssub.s32 128, 128
      %44 = vsyncadd [#allocation4], %s43
      %s46 = sshll.u32 [#allocation5], 4
      %s47 = int_to_ptr.vmem [resolvable:$true] %s46
      %49 = dma.vmem_to_hbm [thread:$0]  %s47, 128, %s1, [#allocation4]
    $region17: #{tpu_custom_call.1} parent=1 // pred_fallthru
      _
    // Predicated region
    $region18: #{tpu_custom_call.1} parent=1 // pred_check
      _
    $region19: #{tpu_custom_call.1} parent=1 // pred_check_branch
      %51 = sbr.rel (0) target = $region21
    $region20: #{tpu_custom_call.1} parent=1 // pred_region
      %52 = dma.done [#allocation4], 128
    $region21: #{tpu_custom_call.1} parent=1 // pred_fallthru
      _
    %53 = vsyncpa [#allocation3], 1
    %54 = vsyncpa [#allocation4], 1

</llo_original>
